<compile_context>
chip_gen: v7x
topology: tpu7x:2x2x1
jax: 0.10.0
libtpu: 0.0.40
codegen_flags: <defaults>
</compile_context>

<pallas_src>
import jax
import jax.numpy as jnp
from jax.experimental import pallas as pl
from jax.experimental.pallas import tpu as pltpu

LATENT = 32
H = 25
OUT = 2

# Max batch tile (lane dimension). Multiple of 128. At 2048 the per-step VMEM
# footprint (2x double-buffered z/out tiles + weights + intermediates) is
# well under 1 MiB, far below every generation's scoped VMEM limit.
_MAX_TILE_B = 2048


def _round_up(x, m):
    return (x + m - 1) // m * m


def _generator_kernel(z_ref, w1_ref, b1_ref, w2_ref, b2_ref, w3_ref, b3_ref,
                      o_ref):
    """Feature-major MLP block: z_ref is (LATENT, Tb), o_ref is (OUT, Tb)."""
    cdt = z_ref.dtype  # MXU operand dtype (f32 or bf16); accumulation is f32.

    # Layer 1: (25, 32) @ (32, Tb) -> (25, Tb); bias/ReLU in f32 on the VPU.
    h1 = jnp.dot(w1_ref[...], z_ref[...], preferred_element_type=jnp.float32)
    h1 = jnp.maximum(h1 + b1_ref[...], 0.0).astype(cdt)

    # Layer 2: (25, 25) @ (25, Tb) -> (25, Tb)
    h2 = jnp.dot(w2_ref[...], h1, preferred_element_type=jnp.float32)
    h2 = jnp.maximum(h2 + b2_ref[...], 0.0).astype(cdt)

    # Layer 3: (2, 25) @ (25, Tb) -> (2, Tb); two lane-dense output rows.
    out = jnp.dot(w3_ref[...], h2, preferred_element_type=jnp.float32)
    o_ref[...] = (out + b3_ref[...]).astype(o_ref.dtype)


def generator_forward(z, params, *, compute_dtype=jnp.float32, tile_b=None):
    """z: (B, LATENT) float32 -> (B, OUT) float32.

    params: dict with torch-style weights w1 (25,32), w2 (25,25), w3 (2,25)
    and column biases b1 (25,1), b2 (25,1), b3 (2,1).
    """
    B = z.shape[0]
    if tile_b is None:
        tile_b = min(_MAX_TILE_B, _round_up(B, 128))
    B_pad = _round_up(B, tile_b)

    # Feature-major: batch on lanes (last dim), features on sublanes.
    z_t = jnp.transpose(z).astype(compute_dtype)
    if B_pad != B:
        z_t = jnp.pad(z_t, ((0, 0), (0, B_pad - B)))

    w1 = params["w1"].astype(compute_dtype)
    w2 = params["w2"].astype(compute_dtype)
    w3 = params["w3"].astype(compute_dtype)
    b1 = params["b1"].astype(jnp.float32)
    b2 = params["b2"].astype(jnp.float32)
    b3 = params["b3"].astype(jnp.float32)

    grid = (B_pad // tile_b,)

    def const(shape):
        return pl.BlockSpec(shape, lambda i: (0,) * len(shape))

    itemsize = jnp.dtype(compute_dtype).itemsize
    flops = 2 * B_pad * (LATENT * H + H * H + H * OUT)
    bytes_accessed = (
        LATENT * B_pad * itemsize          # z read
        + OUT * B_pad * 4                  # out write (f32)
        + (H * LATENT + H * H + OUT * H) * itemsize   # weights
        + (H + H + OUT) * 4                # biases (f32)
    )

    out_t = pl.pallas_call(
        _generator_kernel,
        out_shape=jax.ShapeDtypeStruct((OUT, B_pad), jnp.float32),
        grid=grid,
        in_specs=[
            pl.BlockSpec((LATENT, tile_b), lambda i: (0, i)),
            const(w1.shape), const(b1.shape),
            const(w2.shape), const(b2.shape),
            const(w3.shape), const(b3.shape),
        ],
        out_specs=pl.BlockSpec((OUT, tile_b), lambda i: (0, i)),
        compiler_params=pltpu.CompilerParams(
            dimension_semantics=("parallel",)),
        cost_estimate=pl.CostEstimate(
            flops=flops, bytes_accessed=bytes_accessed, transcendentals=0),
    )(z_t, w1, b1, w2, b2, w3, b3)

    # Drop batch padding, return batch-major (B, OUT) to match the torch module.
    return jnp.transpose(out_t[:, :B])


def init_params(key):
    """torch.nn.Linear default init: U(-1/sqrt(fan_in), +1/sqrt(fan_in))."""
    ks = jax.random.split(key, 6)

    def linear(kw, kb, fan_in, fan_out):
        bound = 1.0 / jnp.sqrt(jnp.float32(fan_in))
        # torch layout: weight (out, in), bias as (out, 1) column.
        w = jax.random.uniform(kw, (fan_out, fan_in), jnp.float32, -bound, bound)
        b = jax.random.uniform(kb, (fan_out, 1), jnp.float32, -bound, bound)
        return w, b

    w1, b1 = linear(ks[0], ks[1], LATENT, H)
    w2, b2 = linear(ks[2], ks[3], H, H)
    w3, b3 = linear(ks[4], ks[5], H, OUT)
    return {"w1": w1, "b1": b1, "w2": w2, "b2": b2, "w3": w3, "b3": b3}


def _reference(z, p):
    h = jnp.maximum(z @ p["w1"].T + p["b1"][:, 0], 0.0)
    h = jnp.maximum(h @ p["w2"].T + p["b2"][:, 0], 0.0)
    return h @ p["w3"].T + p["b3"][:, 0]


if __name__ == "__main__":
    key = jax.random.PRNGKey(0)
    k_params, k_z = jax.random.split(key)

    params = init_params(k_params)
    B = 8
    z = jax.random.normal(k_z, (B, LATENT), jnp.float32)

    ref = _reference(z, params)

    # f32 path (bit-comparable to the reference).
    out = jax.block_until_ready(generator_forward(z, params))
    assert out.shape == (B, OUT), out.shape
    assert jnp.allclose(out, ref, atol=1e-5, rtol=1e-5), "f32 mismatch vs reference"

    # bf16-operand path (HBM-bandwidth optimization for v6e/v7x); f32 accumulation.
    out_bf16 = jax.block_until_ready(
        generator_forward(z, params, compute_dtype=jnp.bfloat16))
    assert out_bf16.shape == (B, OUT), out_bf16.shape
    assert jnp.allclose(out_bf16, ref, atol=5e-2, rtol=5e-2), "bf16 mismatch vs reference"

    print("KERNEL_OK")
</pallas_src>

<mosaic_0001>
module attributes {stable_mosaic.version = 11 : i64} {
  func.func @_generator_kernel(%arg0: i32, %arg1: memref<32x128xf32, #tpu.memory_space<vmem>>, %arg2: memref<25x32xf32, #tpu.memory_space<vmem>>, %arg3: memref<25x1xf32, #tpu.memory_space<vmem>>, %arg4: memref<25x25xf32, #tpu.memory_space<vmem>>, %arg5: memref<25x1xf32, #tpu.memory_space<vmem>>, %arg6: memref<2x25xf32, #tpu.memory_space<vmem>>, %arg7: memref<2x1xf32, #tpu.memory_space<vmem>>, %arg8: memref<2x128xf32, #tpu.memory_space<vmem>>) attributes {dimension_semantics = [#tpu.dimension_semantics<parallel>], iteration_bounds = array<i64: 1>, scalar_prefetch = 0 : i64, scratch_operands = 0 : i64, tpu.core_type = #tpu.core_type<tc>, window_params = [{transform_indices = @transform_0, window_bounds = array<i64: 32, 128>}, {pipeline_mode = #tpu.pipeline_mode<synchronous>, transform_indices = @transform_1, window_bounds = array<i64: 25, 32>}, {pipeline_mode = #tpu.pipeline_mode<synchronous>, transform_indices = @transform_2, window_bounds = array<i64: 25, 1>}, {pipeline_mode = #tpu.pipeline_mode<synchronous>, transform_indices = @transform_3, window_bounds = array<i64: 25, 25>}, {pipeline_mode = #tpu.pipeline_mode<synchronous>, transform_indices = @transform_4, window_bounds = array<i64: 25, 1>}, {pipeline_mode = #tpu.pipeline_mode<synchronous>, transform_indices = @transform_5, window_bounds = array<i64: 2, 25>}, {pipeline_mode = #tpu.pipeline_mode<synchronous>, transform_indices = @transform_6, window_bounds = array<i64: 2, 1>}, {transform_indices = @transform_7, window_bounds = array<i64: 2, 128>}]} {
    %c0 = arith.constant 0 : index
    %c0_0 = arith.constant 0 : index
    %0 = vector.load %arg2[%c0, %c0_0] : memref<25x32xf32, #tpu.memory_space<vmem>>, vector<25x32xf32>
    %c0_1 = arith.constant 0 : index
    %c0_2 = arith.constant 0 : index
    %1 = vector.load %arg1[%c0_1, %c0_2] : memref<32x128xf32, #tpu.memory_space<vmem>>, vector<32x128xf32>
    %cst = arith.constant dense<0.000000e+00> : vector<25x128xf32>
    %2 = tpu.matmul %0, %1, %cst {dimension_numbers = #tpu.dot_dimension_numbers<[1], [0], [0], [1], [0, 0, 1, 1], [], []>} : vector<25x32xf32>, vector<32x128xf32>, vector<25x128xf32> -> vector<25x128xf32>
    %c0_3 = arith.constant 0 : index
    %c0_4 = arith.constant 0 : index
    %3 = vector.load %arg3[%c0_3, %c0_4] : memref<25x1xf32, #tpu.memory_space<vmem>>, vector<25x1xf32>
    %4 = vector.broadcast %3 : vector<25x1xf32> to vector<25x128xf32>
    %5 = arith.addf %2, %4 : vector<25x128xf32>
    %cst_5 = arith.constant 0.000000e+00 : f32
    %6 = vector.broadcast %cst_5 : f32 to vector<25x128xf32>
    %7 = arith.maximumf %5, %6 : vector<25x128xf32>
    %c0_6 = arith.constant 0 : index
    %c0_7 = arith.constant 0 : index
    %8 = vector.load %arg4[%c0_6, %c0_7] : memref<25x25xf32, #tpu.memory_space<vmem>>, vector<25x25xf32>
    %cst_8 = arith.constant dense<0.000000e+00> : vector<25x128xf32>
    %9 = tpu.matmul %8, %7, %cst_8 {dimension_numbers = #tpu.dot_dimension_numbers<[1], [0], [0], [1], [0, 0, 1, 1], [], []>} : vector<25x25xf32>, vector<25x128xf32>, vector<25x128xf32> -> vector<25x128xf32>
    %c0_9 = arith.constant 0 : index
    %c0_10 = arith.constant 0 : index
    %10 = vector.load %arg5[%c0_9, %c0_10] : memref<25x1xf32, #tpu.memory_space<vmem>>, vector<25x1xf32>
    %11 = vector.broadcast %10 : vector<25x1xf32> to vector<25x128xf32>
    %12 = arith.addf %9, %11 : vector<25x128xf32>
    %cst_11 = arith.constant 0.000000e+00 : f32
    %13 = vector.broadcast %cst_11 : f32 to vector<25x128xf32>
    %14 = arith.maximumf %12, %13 : vector<25x128xf32>
    %c0_12 = arith.constant 0 : index
    %c0_13 = arith.constant 0 : index
    %15 = vector.load %arg6[%c0_12, %c0_13] : memref<2x25xf32, #tpu.memory_space<vmem>>, vector<2x25xf32>
    %cst_14 = arith.constant dense<0.000000e+00> : vector<2x128xf32>
    %16 = tpu.matmul %15, %14, %cst_14 {dimension_numbers = #tpu.dot_dimension_numbers<[1], [0], [0], [1], [0, 0, 1, 1], [], []>} : vector<2x25xf32>, vector<25x128xf32>, vector<2x128xf32> -> vector<2x128xf32>
    %c0_15 = arith.constant 0 : index
    %c0_16 = arith.constant 0 : index
    %17 = vector.load %arg7[%c0_15, %c0_16] : memref<2x1xf32, #tpu.memory_space<vmem>>, vector<2x1xf32>
    %18 = vector.broadcast %17 : vector<2x1xf32> to vector<2x128xf32>
    %19 = arith.addf %16, %18 : vector<2x128xf32>
    %c0_17 = arith.constant 0 : index
    %c0_18 = arith.constant 0 : index
    %20 = vector.load %arg8[%c0_17, %c0_18] : memref<2x128xf32, #tpu.memory_space<vmem>>, vector<2x128xf32>
    tpu.vector_store %arg8[%c0_17, %c0_18], %19 {strides = array<i32>} : memref<2x128xf32, #tpu.memory_space<vmem>>, vector<2x128xf32>,
    return
  }
  func.func @transform_0(%arg0: i32) -> (i32, i32) {
    %c0_i32 = arith.constant 0 : i32
    %c0_i32_0 = arith.constant 0 : i32
    return %c0_i32, %arg0 : i32, i32
  }
  func.func @transform_1(%arg0: i32) -> (i32, i32) {
    %c0_i32 = arith.constant 0 : i32
    %c0_i32_0 = arith.constant 0 : i32
    %c0_i32_1 = arith.constant 0 : i32
    return %c0_i32, %c0_i32_0 : i32, i32
  }
  func.func @transform_2(%arg0: i32) -> (i32, i32) {
    %c0_i32 = arith.constant 0 : i32
    %c0_i32_0 = arith.constant 0 : i32
    %c0_i32_1 = arith.constant 0 : i32
    return %c0_i32, %c0_i32_0 : i32, i32
  }
  func.func @transform_3(%arg0: i32) -> (i32, i32) {
    %c0_i32 = arith.constant 0 : i32
    %c0_i32_0 = arith.constant 0 : i32
    %c0_i32_1 = arith.constant 0 : i32
    return %c0_i32, %c0_i32_0 : i32, i32
  }
  func.func @transform_4(%arg0: i32) -> (i32, i32) {
    %c0_i32 = arith.constant 0 : i32
    %c0_i32_0 = arith.constant 0 : i32
    %c0_i32_1 = arith.constant 0 : i32
    return %c0_i32, %c0_i32_0 : i32, i32
  }
  func.func @transform_5(%arg0: i32) -> (i32, i32) {
    %c0_i32 = arith.constant 0 : i32
    %c0_i32_0 = arith.constant 0 : i32
    %c0_i32_1 = arith.constant 0 : i32
    return %c0_i32, %c0_i32_0 : i32, i32
  }
  func.func @transform_6(%arg0: i32) -> (i32, i32) {
    %c0_i32 = arith.constant 0 : i32
    %c0_i32_0 = arith.constant 0 : i32
    %c0_i32_1 = arith.constant 0 : i32
    return %c0_i32, %c0_i32_0 : i32, i32
  }
  func.func @transform_7(%arg0: i32) -> (i32, i32) {
    %c0_i32 = arith.constant 0 : i32
    %c0_i32_0 = arith.constant 0 : i32
    return %c0_i32, %arg0 : i32, i32
  }
}

</mosaic_0001>

<llo_original>
// kernel: tpu_custom_call.1
$region0: #{tpu_custom_call.1}
  #allocation0 [shape = 'u32[]', space=smem, size = 0x4, offset = 0x4, fixed_abs, tag = 'smem constant byte address 0x4 - core index']
  #allocation1 [shape = 'u32[144,128]{1,0:T(1,128)}', space=vmem, size = 0x12000, scoped, tag = 'internal scratch']
  %s0 = inlined_call_operand.vmem [shape: f32[32,128], index: 0, kind: input, shape index: {}]
  %s1 = inlined_call_operand.vmem [shape: f32[25,32], index: 1, kind: input, shape index: {}]
  %s2 = inlined_call_operand.vmem [shape: f32[25,1], index: 2, kind: input, shape index: {}]
  %s3 = inlined_call_operand.hbm [shape: f32[25,25], index: 3, kind: input, shape index: {}]
  %s4 = inlined_call_operand.vmem [shape: f32[25,1], index: 4, kind: input, shape index: {}]
  %s5 = inlined_call_operand.vmem [shape: f32[2,25], index: 5, kind: input, shape index: {}]
  %s6 = inlined_call_operand.vmem [shape: f32[2,1], index: 6, kind: input, shape index: {}]
  %s7 = inlined_call_operand.hbm [shape: f32[2,128], index: 7, kind: output, shape index: {}]
  %s8 = sld [smem:[#allocation0]]
  $region42: #{tpu_custom_call.1} parent=0
    _
  %s10 = ssub.s32 1, %s8
  %s11 = scalar_select 0, %s10, %s8
  $region1: #{tpu_custom_call.1} parent=0
    #allocation2 [shape = 'u8[16384]{0}', space=vmem, size = 0x4000, scoped, tag = 'input window, operand 3, single buffered']
    #allocation3 [shape = 's32[1]{0}', space=sflag, size = 0x4, scoped, tag = 'scoped memory for tpu_custom_call.1']
    #allocation4 [shape = 's32[1]{0}', space=sflag, size = 0x4, scoped, tag = 'scoped memory for tpu_custom_call.1']
    #allocation5 [shape = 'u8[1024]{0}', space=vmem, size = 0x400, scoped, tag = 'output window, operand 0, single buffered']
    %12 = vsyncpa [#allocation3], 0
    %13 = vsyncpa [#allocation4], 0
    // Predicated region
    $region2: #{tpu_custom_call.1} parent=1 // pred_check
      _
    $region3: #{tpu_custom_call.1} parent=1 // pred_check_branch
      %15 = sbr.rel (0) target = $region5
    $region4: #{tpu_custom_call.1} parent=1 // pred_region
      _
    $region5: #{tpu_custom_call.1} parent=1 // pred_fallthru
      _
    // Predicated region
    $region6: #{tpu_custom_call.1} parent=1 // pred_check
      _
    $region7: #{tpu_custom_call.1} parent=1 // pred_check_branch
      %17 = sbr.rel (0) target = $region9
    $region8: #{tpu_custom_call.1} parent=1 // pred_region
      _
    $region9: #{tpu_custom_call.1} parent=1 // pred_fallthru
      _
    // Predicated region
    $region10: #{tpu_custom_call.1} parent=1 // pred_check
      _
    $region11: #{tpu_custom_call.1} parent=1 // pred_check_branch
      %19 = sbr.rel (0) target = $region13
    $region12: #{tpu_custom_call.1} parent=1 // pred_region
      _
    $region13: #{tpu_custom_call.1} parent=1 // pred_fallthru
      _
    // Predicated region
    $region14: #{tpu_custom_call.1} parent=1 // pred_check
      _
    $region15: #{tpu_custom_call.1} parent=1 // pred_check_branch
      %21 = sbr.rel (0) target = $region17
    $region16: #{tpu_custom_call.1} parent=1 // pred_region
      %s23 = ssub.s32 512, 512
      %24 = vsyncadd [#allocation3], %s23
      %s25 = sshll.u32 [#allocation2], 4
      %s26 = int_to_ptr.vmem [resolvable:$true] %s25
      %31 = dma.hbm_to_vmem [thread:$0]  %s3, 512, %s26, [#allocation3], 128, 128, 8
    $region17: #{tpu_custom_call.1} parent=1 // pred_fallthru
      _
    // Predicated region
    $region18: #{tpu_custom_call.1} parent=1 // pred_check
      _
    $region19: #{tpu_custom_call.1} parent=1 // pred_check_branch
      %33 = sbr.rel (0) target = $region21
    $region20: #{tpu_custom_call.1} parent=1 // pred_region
      _
    $region21: #{tpu_custom_call.1} parent=1 // pred_fallthru
      _
    // Predicated region
    $region22: #{tpu_custom_call.1} parent=1 // pred_check
      _
    $region23: #{tpu_custom_call.1} parent=1 // pred_check_branch
      %35 = sbr.rel (0) target = $region25
    $region24: #{tpu_custom_call.1} parent=1 // pred_region
      _
    $region25: #{tpu_custom_call.1} parent=1 // pred_fallthru
      _
    // Predicated region
    $region26: #{tpu_custom_call.1} parent=1 // pred_check
      _
    $region27: #{tpu_custom_call.1} parent=1 // pred_check_branch
      %37 = sbr.rel (0) target = $region29
    $region28: #{tpu_custom_call.1} parent=1 // pred_region
      _
    $region29: #{tpu_custom_call.1} parent=1 // pred_fallthru
      _
    // Predicated region
    $region30: #{tpu_custom_call.1} parent=1 // pred_check
      _
    $region31: #{tpu_custom_call.1} parent=1 // pred_check_branch
      %39 = sbr.rel (0) target = $region33
    $region32: #{tpu_custom_call.1} parent=1 // pred_region
      %40 = dma.done [#allocation3], 512
    $region33: #{tpu_custom_call.1} parent=1 // pred_fallthru
      _
    %v41 = vld [vmem:[%s1] sm:$0xff]
    %v42 = vld [vmem:[%s1 + $0x8] sm:$0xff]
    %v43 = vld [vmem:[%s1 + $0x10] sm:$0xff]
    %v44 = vld [vmem:[%s1 + $0x18] sm:$0x1]
    %v45 = vld [vmem:[%s0] sm:$0xff]
    %v46 = vld [vmem:[%s0 + $0x8] sm:$0xff]
    %v47 = vld [vmem:[%s0 + $0x10] sm:$0xff]
    %v48 = vld [vmem:[%s0 + $0x18] sm:$0xff]
    %v49 = vld [vmem:[%s2] sm:$0xff]
    %v50 = vld [vmem:[%s2 + $0x8] sm:$0xff]
    %v51 = vld [vmem:[%s2 + $0x10] sm:$0xff]
    %v52 = vld [vmem:[%s2 + $0x18] sm:$0x1]
    %54 = vset.pattern.permute.xlu0 0
    %55 = vperm.xlu0 %54, %v49
    %v56 = vpop.permute.xlu0 %55
    %59 = vset.pattern.permute.xlu0 0
    %60 = vperm.xlu0 %59, %v50
    %v61 = vpop.permute.xlu0 %60
    %64 = vset.pattern.permute.xlu0 0
    %65 = vperm.xlu0 %64, %v51
    %v66 = vpop.permute.xlu0 %65
    %69 = vset.pattern.permute.xlu0 0
    %70 = vperm.xlu0 %69, %v52
    %v71 = vpop.permute.xlu0 %70
    %vm73 = vcmask 261120
    %v75 = vsel %vm73, %v41, 0
    %v78 = vsel %vm73, %v42, 0
    %v81 = vsel %vm73, %v43, 0
    %v84 = vsel %vm73, %v44, 0
    %86 = vmatprep.subr.mxu0 0.0
    %87 = vmatpush1.msra.mxu0 %v45
    %88 = vmatprep.subr.mxu0 0.0
    %89 = vmatpush1.msra.mxu0 %v46
    %90 = vmatprep.subr.mxu0 0.0
    %91 = vmatpush1.msra.mxu0 %v47
    %92 = vmatprep.subr.mxu0 0.0
    %93 = vmatpush1.msra.mxu0 %v48
    %94 = vmatprep.subr.mxu0 0.0
    %95 = vmatpush1.msra.mxu0 0.0
    %96 = vmatprep.subr.mxu0 0.0
    %97 = vmatpush1.msra.mxu0 0.0
    %98 = vmatprep.subr.mxu0 0.0
    %99 = vmatpush1.msra.mxu0 0.0
    %100 = vmatprep.subr.mxu0 0.0
    %101 = vmatpush1.msra.mxu0 0.0
    %102 = vmatprep.subr.mxu0 0.0
    %103 = vmatpush1.msra.mxu0 0.0
    %104 = vmatprep.subr.mxu0 0.0
    %105 = vmatpush1.msra.mxu0 0.0
    %106 = vmatprep.subr.mxu0 0.0
    %107 = vmatpush1.msra.mxu0 0.0
    %108 = vmatprep.subr.mxu0 0.0
    %109 = vmatpush1.msra.mxu0 0.0
    %110 = vmatprep.subr.mxu0 0.0
    %111 = vmatpush1.msra.mxu0 0.0
    %112 = vmatprep.subr.mxu0 0.0
    %113 = vmatpush1.msra.mxu0 0.0
    %114 = vmatprep.subr.mxu0 0.0
    %115 = vmatpush1.msra.mxu0 0.0
    %116 = vmatprep.subr.mxu0 0.0
    %117 = vmatpush1.msra.mxu0 0.0
    %118 = vmatprep.subr.mxu0 0.0
    %119 = vmatpush1.msra.mxu0 0.0
    %120 = vmatprep.subr.mxu0 0.0
    %121 = vmatpush1.msra.mxu0 0.0
    %122 = vmatprep.subr.mxu0 0.0
    %123 = vmatpush1.msra.mxu0 0.0
    %124 = vmatprep.subr.mxu0 0.0
    %125 = vmatpush1.msra.mxu0 0.0
    %126 = vmatprep.subr.mxu0 0.0
    %127 = vmatpush1.msra.mxu0 0.0
    %128 = vmatprep.subr.mxu0 0.0
    %129 = vmatpush1.msra.mxu0 0.0
    %130 = vmatprep.subr.mxu0 0.0
    %131 = vmatpush1.msra.mxu0 0.0
    %132 = vmatprep.subr.mxu0 0.0
    %133 = vmatpush1.msra.mxu0 0.0
    %134 = vmatprep.subr.mxu0 0.0
    %135 = vmatpush1.msra.mxu0 0.0
    %136 = vmatprep.subr.mxu0 0.0
    %137 = vmatpush1.msra.mxu0 0.0
    %138 = vmatprep.subr.mxu0 0.0
    %139 = vmatpush1.msra.mxu0 0.0
    %140 = vmatprep.subr.mxu0 0.0
    %141 = vmatpush1.msra.mxu0 0.0
    %142 = vmatprep.subr.mxu0 0.0
    %143 = vmatpush1.msra.mxu0 0.0
    %144 = vmatprep.subr.mxu0 0.0
    %145 = vmatpush1.msra.mxu0 0.0
    %146 = vmatprep.subr.mxu0 0.0
    %147 = vmatpush1.msra.mxu0 0.0
    %148 = vmatprep.subr.mxu0 0.0
    %149 = vmatpush1.msra.mxu0 0.0
    %150 = vmatprep.mubr.f32.mxu0 0.0
    %151 = vmatmul.mubr.f32.gmra.mrb[0].mxu0 %v75
    %v152 = vpop.f32.mrb[0].mxu0
    %v153 = vadd.f32 %v56, %v152
    %v154 = vpop.f32.mrb[0].mxu0
    %155 = vmatprep.mubr.f32.mxu0 0.0
    %156 = vmatmul.mubr.f32.gmra.mrb[0].mxu0 %v78
    %v157 = vpop.f32.mrb[0].mxu0
    %v158 = vadd.f32 %v61, %v157
    %v159 = vpop.f32.mrb[0].mxu0
    %160 = vmatprep.mubr.f32.mxu0 0.0
    %161 = vmatmul.mubr.f32.gmra.mrb[0].mxu0 %v81
    %v162 = vpop.f32.mrb[0].mxu0
    %v163 = vadd.f32 %v66, %v162
    %v164 = vpop.f32.mrb[0].mxu0
    %165 = vmatprep.mubr.f32.mxu0 0.0
    %166 = vmatmul.mubr.f32.gmra.mrb[0].mxu0 %v84
    %v167 = vpop.f32.mrb[0].mxu0
    %v168 = vadd.f32 %v71, %v167
    %v169 = vpop.f32.mrb[0].mxu0
    %170 = vdwg.mxu0
    %v171 = vmax.f32 %v153, 0.0
    %v172 = vmax.f32 %v158, 0.0
    %v173 = vmax.f32 %v163, 0.0
    %v174 = vmax.f32 %v168, 0.0
    %v175 = vld [vmem:[#allocation2] sm:$0xff]
    %v176 = vld [vmem:[#allocation2 + $0x8] sm:$0xff]
    %v177 = vld [vmem:[#allocation2 + $0x10] sm:$0xff]
    %v178 = vld [vmem:[#allocation2 + $0x18] sm:$0x1]
    %v179 = vld [vmem:[%s4] sm:$0xff]
    %v180 = vld [vmem:[%s4 + $0x8] sm:$0xff]
    %v181 = vld [vmem:[%s4 + $0x10] sm:$0xff]
    %v182 = vld [vmem:[%s4 + $0x18] sm:$0x1]
    %184 = vset.pattern.permute.xlu0 0
    %185 = vperm.xlu0 %184, %v179
    %v186 = vpop.permute.xlu0 %185
    %189 = vset.pattern.permute.xlu0 0
    %190 = vperm.xlu0 %189, %v180
    %v191 = vpop.permute.xlu0 %190
    %194 = vset.pattern.permute.xlu0 0
    %195 = vperm.xlu0 %194, %v181
    %v196 = vpop.permute.xlu0 %195
    %199 = vset.pattern.permute.xlu0 0
    %200 = vperm.xlu0 %199, %v182
    %v201 = vpop.permute.xlu0 %200
    %vm203 = vcmask 203776
    %v205 = vsel %vm203, %v175, 0
    %v208 = vsel %vm203, %v176, 0
    %v211 = vsel %vm203, %v177, 0
    %v214 = vsel %vm203, %v178, 0
    %vm216 = vcmask 1040384
    %v218 = vsel %vm216, %v174, 0
    %220 = vmatprep.subr.mxu0 0.0
    %221 = vmatpush1.msra.mxu0 %v171
    %222 = vmatprep.subr.mxu0 0.0
    %223 = vmatpush1.msra.mxu0 %v172
    %224 = vmatprep.subr.mxu0 0.0
    %225 = vmatpush1.msra.mxu0 %v173
    %226 = vmatprep.subr.mxu0 0.0
    %227 = vmatpush1.msra.mxu0 %v218
    %228 = vmatprep.subr.mxu0 0.0
    %229 = vmatpush1.msra.mxu0 0.0
    %230 = vmatprep.subr.mxu0 0.0
    %231 = vmatpush1.msra.mxu0 0.0
    %232 = vmatprep.subr.mxu0 0.0
    %233 = vmatpush1.msra.mxu0 0.0
    %234 = vmatprep.subr.mxu0 0.0
    %235 = vmatpush1.msra.mxu0 0.0
    %236 = vmatprep.subr.mxu0 0.0
    %237 = vmatpush1.msra.mxu0 0.0
    %238 = vmatprep.subr.mxu0 0.0
    %239 = vmatpush1.msra.mxu0 0.0
    %240 = vmatprep.subr.mxu0 0.0
    %241 = vmatpush1.msra.mxu0 0.0
    %242 = vmatprep.subr.mxu0 0.0
    %243 = vmatpush1.msra.mxu0 0.0
    %244 = vmatprep.subr.mxu0 0.0
    %245 = vmatpush1.msra.mxu0 0.0
    %246 = vmatprep.subr.mxu0 0.0
    %247 = vmatpush1.msra.mxu0 0.0
    %248 = vmatprep.subr.mxu0 0.0
    %249 = vmatpush1.msra.mxu0 0.0
    %250 = vmatprep.subr.mxu0 0.0
    %251 = vmatpush1.msra.mxu0 0.0
    %252 = vmatprep.subr.mxu0 0.0
    %253 = vmatpush1.msra.mxu0 0.0
    %254 = vmatprep.subr.mxu0 0.0
    %255 = vmatpush1.msra.mxu0 0.0
    %256 = vmatprep.subr.mxu0 0.0
    %257 = vmatpush1.msra.mxu0 0.0
    %258 = vmatprep.subr.mxu0 0.0
    %259 = vmatpush1.msra.mxu0 0.0
    %260 = vmatprep.subr.mxu0 0.0
    %261 = vmatpush1.msra.mxu0 0.0
    %262 = vmatprep.subr.mxu0 0.0
    %263 = vmatpush1.msra.mxu0 0.0
    %264 = vmatprep.subr.mxu0 0.0
    %265 = vmatpush1.msra.mxu0 0.0
    %266 = vmatprep.subr.mxu0 0.0
    %267 = vmatpush1.msra.mxu0 0.0
    %268 = vmatprep.subr.mxu0 0.0
    %269 = vmatpush1.msra.mxu0 0.0
    %270 = vmatprep.subr.mxu0 0.0
    %271 = vmatpush1.msra.mxu0 0.0
    %272 = vmatprep.subr.mxu0 0.0
    %273 = vmatpush1.msra.mxu0 0.0
    %274 = vmatprep.subr.mxu0 0.0
    %275 = vmatpush1.msra.mxu0 0.0
    %276 = vmatprep.subr.mxu0 0.0
    %277 = vmatpush1.msra.mxu0 0.0
    %278 = vmatprep.subr.mxu0 0.0
    %279 = vmatpush1.msra.mxu0 0.0
    %280 = vmatprep.subr.mxu0 0.0
    %281 = vmatpush1.msra.mxu0 0.0
    %282 = vmatprep.subr.mxu0 0.0
    %283 = vmatpush1.msra.mxu0 0.0
    %284 = vmatprep.mubr.f32.mxu0 0.0
    %285 = vmatmul.mubr.f32.gmra.mrb[0].mxu0 %v205
    %v286 = vpop.f32.mrb[0].mxu0
    %v287 = vadd.f32 %v186, %v286
    %v288 = vpop.f32.mrb[0].mxu0
    %289 = vmatprep.mubr.f32.mxu0 0.0
    %290 = vmatmul.mubr.f32.gmra.mrb[0].mxu0 %v208
    %v291 = vpop.f32.mrb[0].mxu0
    %v292 = vadd.f32 %v191, %v291
    %v293 = vpop.f32.mrb[0].mxu0
    %294 = vmatprep.mubr.f32.mxu0 0.0
    %295 = vmatmul.mubr.f32.gmra.mrb[0].mxu0 %v211
    %v296 = vpop.f32.mrb[0].mxu0
    %v297 = vadd.f32 %v196, %v296
    %v298 = vpop.f32.mrb[0].mxu0
    %299 = vmatprep.mubr.f32.mxu0 0.0
    %300 = vmatmul.mubr.f32.gmra.mrb[0].mxu0 %v214
    %v301 = vpop.f32.mrb[0].mxu0
    %v302 = vadd.f32 %v201, %v301
    %v303 = vpop.f32.mrb[0].mxu0
    %304 = vdwg.mxu0
    %v305 = vmax.f32 %v287, 0.0
    %v306 = vmax.f32 %v292, 0.0
    %v307 = vmax.f32 %v297, 0.0
    %v308 = vmax.f32 %v302, 0.0
    %v309 = vld [vmem:[%s5] sm:$0x3]
    %v310 = vld [vmem:[%s6] sm:$0x3]
    %312 = vset.pattern.permute.xlu0 0
    %313 = vperm.xlu0 %312, %v310
    %v314 = vpop.permute.xlu0 %313
    %v317 = vsel %vm203, %v309, 0
    %v320 = vsel %vm216, %v308, 0
    %322 = vmatprep.subr.mxu0 0.0
    %323 = vmatpush1.msra.mxu0 %v305
    %324 = vmatprep.subr.mxu0 0.0
    %325 = vmatpush1.msra.mxu0 %v306
    %326 = vmatprep.subr.mxu0 0.0
    %327 = vmatpush1.msra.mxu0 %v307
    %328 = vmatprep.subr.mxu0 0.0
    %329 = vmatpush1.msra.mxu0 %v320
    %330 = vmatprep.subr.mxu0 0.0
    %331 = vmatpush1.msra.mxu0 0.0
    %332 = vmatprep.subr.mxu0 0.0
    %333 = vmatpush1.msra.mxu0 0.0
    %334 = vmatprep.subr.mxu0 0.0
    %335 = vmatpush1.msra.mxu0 0.0
    %336 = vmatprep.subr.mxu0 0.0
    %337 = vmatpush1.msra.mxu0 0.0
    %338 = vmatprep.subr.mxu0 0.0
    %339 = vmatpush1.msra.mxu0 0.0
    %340 = vmatprep.subr.mxu0 0.0
    %341 = vmatpush1.msra.mxu0 0.0
    %342 = vmatprep.subr.mxu0 0.0
    %343 = vmatpush1.msra.mxu0 0.0
    %344 = vmatprep.subr.mxu0 0.0
    %345 = vmatpush1.msra.mxu0 0.0
    %346 = vmatprep.subr.mxu0 0.0
    %347 = vmatpush1.msra.mxu0 0.0
    %348 = vmatprep.subr.mxu0 0.0
    %349 = vmatpush1.msra.mxu0 0.0
    %350 = vmatprep.subr.mxu0 0.0
    %351 = vmatpush1.msra.mxu0 0.0
    %352 = vmatprep.subr.mxu0 0.0
    %353 = vmatpush1.msra.mxu0 0.0
    %354 = vmatprep.subr.mxu0 0.0
    %355 = vmatpush1.msra.mxu0 0.0
    %356 = vmatprep.subr.mxu0 0.0
    %357 = vmatpush1.msra.mxu0 0.0
    %358 = vmatprep.subr.mxu0 0.0
    %359 = vmatpush1.msra.mxu0 0.0
    %360 = vmatprep.subr.mxu0 0.0
    %361 = vmatpush1.msra.mxu0 0.0
    %362 = vmatprep.subr.mxu0 0.0
    %363 = vmatpush1.msra.mxu0 0.0
    %364 = vmatprep.subr.mxu0 0.0
    %365 = vmatpush1.msra.mxu0 0.0
    %366 = vmatprep.subr.mxu0 0.0
    %367 = vmatpush1.msra.mxu0 0.0
    %368 = vmatprep.subr.mxu0 0.0
    %369 = vmatpush1.msra.mxu0 0.0
    %370 = vmatprep.subr.mxu0 0.0
    %371 = vmatpush1.msra.mxu0 0.0
    %372 = vmatprep.subr.mxu0 0.0
    %373 = vmatpush1.msra.mxu0 0.0
    %374 = vmatprep.subr.mxu0 0.0
    %375 = vmatpush1.msra.mxu0 0.0
    %376 = vmatprep.subr.mxu0 0.0
    %377 = vmatpush1.msra.mxu0 0.0
    %378 = vmatprep.subr.mxu0 0.0
    %379 = vmatpush1.msra.mxu0 0.0
    %380 = vmatprep.subr.mxu0 0.0
    %381 = vmatpush1.msra.mxu0 0.0
    %382 = vmatprep.subr.mxu0 0.0
    %383 = vmatpush1.msra.mxu0 0.0
    %384 = vmatprep.subr.mxu0 0.0
    %385 = vmatpush1.msra.mxu0 0.0
    %386 = vmatprep.mubr.f32.mxu0 0.0
    %387 = vmatmul.mubr.f32.gmra.mrb[0].mxu0 %v317
    %v388 = vpop.f32.mrb[0].mxu0
    %v389 = vadd.f32 %v314, %v388
    %v390 = vpop.f32.mrb[0].mxu0
    %391 = vdwg.mxu0
    %392 = vst [vmem:[#allocation5] sm:$0x3] %v389
    // Predicated region
    $region34: #{tpu_custom_call.1} parent=1 // pred_check
      _
    $region35: #{tpu_custom_call.1} parent=1 // pred_check_branch
      %394 = sbr.rel (0) target = $region37
    $region36: #{tpu_custom_call.1} parent=1 // pred_region
      %s396 = ssub.s32 32, 32
      %397 = vsyncadd [#allocation4], %s396
      %s399 = sshll.u32 [#allocation5], 4
      %s400 = int_to_ptr.vmem [resolvable:$true] %s399
      %402 = dma.vmem_to_hbm [thread:$0]  %s400, 32, %s7, [#allocation4]
    $region37: #{tpu_custom_call.1} parent=1 // pred_fallthru
      _
    // Predicated region
    $region38: #{tpu_custom_call.1} parent=1 // pred_check
      _
    $region39: #{tpu_custom_call.1} parent=1 // pred_check_branch
      %404 = sbr.rel (0) target = $region41
    $region40: #{tpu_custom_call.1} parent=1 // pred_region
      %405 = dma.done [#allocation4], 32
    $region41: #{tpu_custom_call.1} parent=1 // pred_fallthru
      _
    %406 = vsyncpa [#allocation3], 1
    %407 = vsyncpa [#allocation4], 1

</llo_original>
